<compile_context>
chip_gen: v7x
topology: tpu7x:2x2x1
jax: 0.10.0
libtpu: 0.0.40
codegen_flags: <defaults>
</compile_context>

<pallas_src>
import math
from functools import partial

import jax
import jax.numpy as jnp
from jax.experimental import pallas as pl
from jax.experimental.pallas import tpu as pltpu


def _round_up(x, m):
    return ((x + m - 1) // m) * m


def _choose_bm(B):
    """Pick the batch tile: minimize padded rows, require >= 2 grid tiles once
    B is large enough (so both v7x TensorCores get work via the 'parallel'
    axis), and among equal-waste options prefer the largest tile (fewer
    ~0.35us grid steps on the single-TC v5e/v6e)."""
    B8 = _round_up(B, 8)
    if B8 <= 128:
        return B8  # tiny batch: single sublane-aligned tile
    cands = set()
    for bm in (512, 256, 128):
        if _round_up(B, bm) // bm >= 2:
            cands.add(bm)
    for n in (2, 4, 8):  # even splits to avoid padding blowup at awkward B
        bm = min(512, _round_up(-(-B // n), 8))
        if bm >= 8 and _round_up(B, bm) // bm >= 2:
            cands.add(bm)
    if not cands:
        return B8
    return min(cands, key=lambda bm: (_round_up(B, bm) - B, -bm))


def _decoder_kernel(t_ref, w1_ref, b1_ref, w2_ref, b2_ref, out_ref):
    # t_ref:(bm,K) bf16, w1_ref:(K,Hp) bf16, b1_ref:(1,Hp) f32,
    # w2_ref:(Hp,Np) bf16, b2_ref:(1,Np) f32, out_ref:(bm,Np) f32.
    h = jnp.dot(t_ref[...], w1_ref[...], preferred_element_type=jnp.float32)
    h = jnp.maximum(h + b1_ref[...], 0.0)                       # bias + ReLU (f32 VPU)
    y = jnp.dot(h.astype(jnp.bfloat16), w2_ref[...],
                preferred_element_type=jnp.float32)
    out_ref[...] = (y + b2_ref[...]).astype(out_ref.dtype)


def prepare_decoder_params(w1, b1, w2, b2, gamma=1.0):
    """One-time weight preparation (hoisted out of the per-call path):
      * fold gamma into w1:  (t*gamma) @ w1 == t @ (gamma*w1)   (exact)
      * zero-pad hidden H->Hp and classes n_y->Np to multiples of 128 so both
        MXU contractions, the bias adds and the output store use full lanes
      * cast the matmul operands to bf16 (f32 accumulation in-kernel); biases
        stay f32. Padding is mathematically neutral (ReLU(0)=0, zero w2 rows).
    Returns (w1_p, b1_p, w2_p, b2_p)."""
    K, H = w1.shape
    n_y = w2.shape[1]
    Hp = _round_up(H, 128)
    Np = _round_up(n_y, 128)
    w1_p = jnp.pad(w1.astype(jnp.float32) * jnp.float32(gamma),
                   ((0, 0), (0, Hp - H))).astype(jnp.bfloat16)
    b1_p = jnp.pad(b1.astype(jnp.float32).reshape(1, H), ((0, 0), (0, Hp - H)))
    w2_p = jnp.pad(w2.astype(jnp.float32),
                   ((0, Hp - H), (0, Np - n_y))).astype(jnp.bfloat16)
    b2_p = jnp.pad(b2.astype(jnp.float32).reshape(1, n_y),
                   ((0, 0), (0, Np - n_y)))
    return w1_p, b1_p, w2_p, b2_p


def decoder_forward(t, w1_p, b1_p, w2_p, b2_p, n_y):
    """Pallas forward on pre-padded params. t:(B,K) -> logits:(B,n_y) f32."""
    B, K = t.shape
    Hp = w1_p.shape[1]
    Np = w2_p.shape[1]

    bm = _choose_bm(B)
    Bp = _round_up(B, bm)

    t_p = t.astype(jnp.bfloat16)
    if Bp != B:
        t_p = jnp.pad(t_p, ((0, Bp - B), (0, 0)))

    out = pl.pallas_call(
        _decoder_kernel,
        out_shape=jax.ShapeDtypeStruct((Bp, Np), jnp.float32),
        grid=(Bp // bm,),
        in_specs=[
            pl.BlockSpec((bm, K), lambda i: (i, 0)),    # activations: tiled over batch
            pl.BlockSpec((K, Hp), lambda i: (0, 0)),    # w1: resident (constant index)
            pl.BlockSpec((1, Hp), lambda i: (0, 0)),    # b1: resident
            pl.BlockSpec((Hp, Np), lambda i: (0, 0)),   # w2: resident
            pl.BlockSpec((1, Np), lambda i: (0, 0)),    # b2: resident
        ],
        out_specs=pl.BlockSpec((bm, Np), lambda i: (i, 0)),
        compiler_params=pltpu.CompilerParams(
            dimension_semantics=("parallel",),
            vmem_limit_bytes=8 << 20,
        ),
    )(t_p, w1_p, b1_p, w2_p, b2_p)

    return out[:B, :n_y]


def make_decoder(w1, b1, w2, b2, gamma=1.0):
    """Prepare (fold/pad/cast) the weights ONCE and return a jitted forward fn
    equivalent to Deterministic_decoder.forward (network_type='mlp_mnist').
    Weights live as jit constants, so repeated calls pay zero prep cost."""
    n_y = w2.shape[1]
    w1_p, b1_p, w2_p, b2_p = prepare_decoder_params(w1, b1, w2, b2, gamma)

    @jax.jit
    def forward(t):
        return decoder_forward(t, w1_p, b1_p, w2_p, b2_p, n_y)

    return forward


if __name__ == "__main__":
    # Shapes consistent with the module: bottleneck K=32, hidden=800, n_y=10.
    B, K, H, n_y = 8, 32, 800, 10
    gamma = 1.3

    key = jax.random.PRNGKey(0)
    k_t, k1, k2, k3, k4 = jax.random.split(key, 5)
    bound1 = 1.0 / math.sqrt(K)
    bound2 = 1.0 / math.sqrt(H)
    t = jax.random.normal(k_t, (B, K), dtype=jnp.float32)
    w1 = jax.random.uniform(k1, (K, H), jnp.float32, -bound1, bound1)
    b1 = jax.random.uniform(k2, (1, H), jnp.float32, -bound1, bound1)
    w2 = jax.random.uniform(k3, (H, n_y), jnp.float32, -bound2, bound2)
    b2 = jax.random.uniform(k4, (1, n_y), jnp.float32, -bound2, bound2)

    decoder = make_decoder(w1, b1, w2, b2, gamma=gamma)
    logits = jax.block_until_ready(decoder(t))

    # Reference in plain f32 JAX (same math as the PyTorch forward).
    ref = jnp.maximum((t * gamma) @ w1 + b1, 0.0) @ w2 + b2
    assert logits.shape == (B, n_y)
    # bf16 MXU operands with f32 accumulation -> ~1e-2-level agreement.
    max_err = float(jnp.max(jnp.abs(logits - ref)))
    assert jnp.allclose(logits, ref, atol=5e-2, rtol=5e-2), f"max abs err {max_err}"

    print("KERNEL_OK")
</pallas_src>

<mosaic_0001>
module attributes {stable_mosaic.version = 11 : i64} {
  func.func @_decoder_kernel(%arg0: i32, %arg1: memref<8x32xbf16, #tpu.memory_space<vmem>>, %arg2: memref<32x896xbf16, #tpu.memory_space<vmem>>, %arg3: memref<1x896xf32, #tpu.memory_space<vmem>>, %arg4: memref<896x128xbf16, #tpu.memory_space<vmem>>, %arg5: memref<1x128xf32, #tpu.memory_space<vmem>>, %arg6: memref<8x128xf32, #tpu.memory_space<vmem>>) attributes {dimension_semantics = [#tpu.dimension_semantics<parallel>], iteration_bounds = array<i64: 1>, scalar_prefetch = 0 : i64, scratch_operands = 0 : i64, tpu.core_type = #tpu.core_type<tc>, window_params = [{transform_indices = @transform_0, window_bounds = array<i64: 8, 32>}, {pipeline_mode = #tpu.pipeline_mode<synchronous>, transform_indices = @transform_1, window_bounds = array<i64: 32, 896>}, {pipeline_mode = #tpu.pipeline_mode<synchronous>, transform_indices = @transform_2, window_bounds = array<i64: 1, 896>}, {pipeline_mode = #tpu.pipeline_mode<synchronous>, transform_indices = @transform_3, window_bounds = array<i64: 896, 128>}, {pipeline_mode = #tpu.pipeline_mode<synchronous>, transform_indices = @transform_4, window_bounds = array<i64: 1, 128>}, {transform_indices = @transform_5, window_bounds = array<i64: 8, 128>}]} {
    %c0 = arith.constant 0 : index
    %c0_0 = arith.constant 0 : index
    %0 = vector.load %arg1[%c0, %c0_0] : memref<8x32xbf16, #tpu.memory_space<vmem>>, vector<8x32xbf16>
    %c0_1 = arith.constant 0 : index
    %c0_2 = arith.constant 0 : index
    %1 = vector.load %arg2[%c0_1, %c0_2] : memref<32x896xbf16, #tpu.memory_space<vmem>>, vector<32x896xbf16>
    %cst = arith.constant dense<0.000000e+00> : vector<8x896xf32>
    %2 = tpu.matmul %0, %1, %cst {dimension_numbers = #tpu.dot_dimension_numbers<[1], [0], [0], [1], [0, 0, 1, 1], [], []>} : vector<8x32xbf16>, vector<32x896xbf16>, vector<8x896xf32> -> vector<8x896xf32>
    %c0_3 = arith.constant 0 : index
    %c0_4 = arith.constant 0 : index
    %3 = vector.load %arg3[%c0_3, %c0_4] : memref<1x896xf32, #tpu.memory_space<vmem>>, vector<1x896xf32>
    %4 = vector.broadcast %3 : vector<1x896xf32> to vector<8x896xf32>
    %5 = arith.addf %2, %4 : vector<8x896xf32>
    %cst_5 = arith.constant 0.000000e+00 : f32
    %6 = vector.broadcast %cst_5 : f32 to vector<8x896xf32>
    %7 = arith.maximumf %5, %6 : vector<8x896xf32>
    %8 = arith.truncf %7 : vector<8x896xf32> to vector<8x896xbf16>
    %c0_6 = arith.constant 0 : index
    %c0_7 = arith.constant 0 : index
    %9 = vector.load %arg4[%c0_6, %c0_7] : memref<896x128xbf16, #tpu.memory_space<vmem>>, vector<896x128xbf16>
    %cst_8 = arith.constant dense<0.000000e+00> : vector<8x128xf32>
    %10 = tpu.matmul %8, %9, %cst_8 {dimension_numbers = #tpu.dot_dimension_numbers<[1], [0], [0], [1], [0, 0, 1, 1], [], []>} : vector<8x896xbf16>, vector<896x128xbf16>, vector<8x128xf32> -> vector<8x128xf32>
    %c0_9 = arith.constant 0 : index
    %c0_10 = arith.constant 0 : index
    %11 = vector.load %arg5[%c0_9, %c0_10] : memref<1x128xf32, #tpu.memory_space<vmem>>, vector<1x128xf32>
    %12 = vector.broadcast %11 : vector<1x128xf32> to vector<8x128xf32>
    %13 = arith.addf %10, %12 : vector<8x128xf32>
    %c0_11 = arith.constant 0 : index
    %c0_12 = arith.constant 0 : index
    %14 = vector.load %arg6[%c0_11, %c0_12] : memref<8x128xf32, #tpu.memory_space<vmem>>, vector<8x128xf32>
    tpu.vector_store %arg6[%c0_11, %c0_12], %13 {strides = array<i32>} : memref<8x128xf32, #tpu.memory_space<vmem>>, vector<8x128xf32>,
    return
  }
  func.func @transform_0(%arg0: i32) -> (i32, i32) {
    %c0_i32 = arith.constant 0 : i32
    %c0_i32_0 = arith.constant 0 : i32
    return %arg0, %c0_i32 : i32, i32
  }
  func.func @transform_1(%arg0: i32) -> (i32, i32) {
    %c0_i32 = arith.constant 0 : i32
    %c0_i32_0 = arith.constant 0 : i32
    %c0_i32_1 = arith.constant 0 : i32
    return %c0_i32, %c0_i32_0 : i32, i32
  }
  func.func @transform_2(%arg0: i32) -> (i32, i32) {
    %c0_i32 = arith.constant 0 : i32
    %c0_i32_0 = arith.constant 0 : i32
    %c0_i32_1 = arith.constant 0 : i32
    return %c0_i32, %c0_i32_0 : i32, i32
  }
  func.func @transform_3(%arg0: i32) -> (i32, i32) {
    %c0_i32 = arith.constant 0 : i32
    %c0_i32_0 = arith.constant 0 : i32
    %c0_i32_1 = arith.constant 0 : i32
    return %c0_i32, %c0_i32_0 : i32, i32
  }
  func.func @transform_4(%arg0: i32) -> (i32, i32) {
    %c0_i32 = arith.constant 0 : i32
    %c0_i32_0 = arith.constant 0 : i32
    %c0_i32_1 = arith.constant 0 : i32
    return %c0_i32, %c0_i32_0 : i32, i32
  }
  func.func @transform_5(%arg0: i32) -> (i32, i32) {
    %c0_i32 = arith.constant 0 : i32
    %c0_i32_0 = arith.constant 0 : i32
    return %arg0, %c0_i32 : i32, i32
  }
}

</mosaic_0001>

<llo_original>
// kernel: forward.1
$region0: #{forward.1}
  #allocation0 [shape = 'u32[]', space=smem, size = 0x4, offset = 0x4, fixed_abs, tag = 'smem constant byte address 0x4 - core index']
  #allocation1 [shape = 'u32[144,128]{1,0:T(1,128)}', space=vmem, size = 0x12000, scoped, tag = 'internal scratch']
  %s0 = inlined_call_operand.vmem [shape: bf16[8,32], index: 0, kind: input, shape index: {}]
  %s1 = inlined_call_operand.vmem [shape: bf16[32,896], index: 1, kind: input, shape index: {}]
  %s2 = inlined_call_operand.vmem [shape: f32[1,896], index: 2, kind: input, shape index: {}]
  %s3 = inlined_call_operand.hbm [shape: bf16[896,128], index: 3, kind: input, shape index: {}]
  %s4 = inlined_call_operand.vmem [shape: f32[1,128], index: 4, kind: input, shape index: {}]
  %s5 = inlined_call_operand.hbm [shape: f32[8,128], index: 5, kind: output, shape index: {}]
  %s6 = sld [smem:[#allocation0]]
  $region34: #{forward.1} parent=0
    _
  %s8 = ssub.s32 1, %s6
  %s9 = scalar_select 0, %s8, %s6
  $region1: #{forward.1} parent=0
    #allocation2 [shape = 'u8[229376]{0}', space=vmem, size = 0x38000, scoped, tag = 'input window, operand 3, single buffered']
    #allocation3 [shape = 's32[1]{0}', space=sflag, size = 0x4, scoped, tag = 'scoped memory for forward.1']
    #allocation4 [shape = 's32[1]{0}', space=sflag, size = 0x4, scoped, tag = 'scoped memory for forward.1']
    #allocation5 [shape = 'u8[4096]{0}', space=vmem, size = 0x1000, scoped, tag = 'output window, operand 0, single buffered']
    %10 = vsyncpa [#allocation3], 0
    %11 = vsyncpa [#allocation4], 0
    // Predicated region
    $region2: #{forward.1} parent=1 // pred_check
      _
    $region3: #{forward.1} parent=1 // pred_check_branch
      %13 = sbr.rel (0) target = $region5
    $region4: #{forward.1} parent=1 // pred_region
      _
    $region5: #{forward.1} parent=1 // pred_fallthru
      _
    // Predicated region
    $region6: #{forward.1} parent=1 // pred_check
      _
    $region7: #{forward.1} parent=1 // pred_check_branch
      %15 = sbr.rel (0) target = $region9
    $region8: #{forward.1} parent=1 // pred_region
      _
    $region9: #{forward.1} parent=1 // pred_fallthru
      _
    // Predicated region
    $region10: #{forward.1} parent=1 // pred_check
      _
    $region11: #{forward.1} parent=1 // pred_check_branch
      %17 = sbr.rel (0) target = $region13
    $region12: #{forward.1} parent=1 // pred_region
      _
    $region13: #{forward.1} parent=1 // pred_fallthru
      _
    // Predicated region
    $region14: #{forward.1} parent=1 // pred_check
      _
    $region15: #{forward.1} parent=1 // pred_check_branch
      %19 = sbr.rel (0) target = $region17
    $region16: #{forward.1} parent=1 // pred_region
      %s21 = ssub.s32 7168, 7168
      %22 = vsyncadd [#allocation3], %s21
      %s23 = sshll.u32 [#allocation2], 4
      %s24 = int_to_ptr.vmem [resolvable:$true] %s23
      %29 = dma.hbm_to_vmem [thread:$0]  %s3, 7168, %s24, [#allocation3], 64, 64, 4
    $region17: #{forward.1} parent=1 // pred_fallthru
      _
    // Predicated region
    $region18: #{forward.1} parent=1 // pred_check
      _
    $region19: #{forward.1} parent=1 // pred_check_branch
      %31 = sbr.rel (0) target = $region21
    $region20: #{forward.1} parent=1 // pred_region
      _
    $region21: #{forward.1} parent=1 // pred_fallthru
      _
    // Predicated region
    $region22: #{forward.1} parent=1 // pred_check
      _
    $region23: #{forward.1} parent=1 // pred_check_branch
      %33 = sbr.rel (0) target = $region25
    $region24: #{forward.1} parent=1 // pred_region
      %34 = dma.done [#allocation3], 7168
    $region25: #{forward.1} parent=1 // pred_fallthru
      _
    %v36 = vld [vmem:[%s0] sm:$0xf]
    %v37 = vld [vmem:[%s1] sm:$0xff]
    %v38 = vld [vmem:[%s1 + $0x8] sm:$0xff]
    %v39 = vld [vmem:[%s1 + $0x10] sm:$0xff]
    %v40 = vld [vmem:[%s1 + $0x18] sm:$0xf]
    %v41 = vld [vmem:[%s1 + $0x1c] sm:$0xff]
    %v42 = vld [vmem:[%s1 + $0x24] sm:$0xff]
    %v43 = vld [vmem:[%s1 + $0x2c] sm:$0xff]
    %v44 = vld [vmem:[%s1 + $0x34] sm:$0xf]
    %v45 = vld [vmem:[%s1 + $0x38] sm:$0xff]
    %v46 = vld [vmem:[%s1 + $0x40] sm:$0xff]
    %v47 = vld [vmem:[%s1 + $0x48] sm:$0xff]
    %v48 = vld [vmem:[%s1 + $0x50] sm:$0xf]
    %v49 = vld [vmem:[%s1 + $0x54] sm:$0xff]
    %v50 = vld [vmem:[%s1 + $0x5c] sm:$0xff]
    %v51 = vld [vmem:[%s1 + $0x64] sm:$0xff]
    %v52 = vld [vmem:[%s1 + $0x6c] sm:$0xf]
    %v53 = vld [vmem:[%s2] sm:$0xff]
    %v55 = vlaneseq
    %v56 = vshrl.u32 %v55, 7
    %v57 = vsub.s32 0, %v56
    %v58 = vrot.slane %v53, %v57
    %v59 = vlaneseq
    %v60 = vshrl.u32 %v59, 7
    %v61 = vsub.s32 1, %v60
    %v62 = vrot.slane %v53, %v61
    %v63 = vlaneseq
    %v64 = vshrl.u32 %v63, 7
    %v65 = vsub.s32 2, %v64
    %v66 = vrot.slane %v53, %v65
    %v67 = vlaneseq
    %v68 = vshrl.u32 %v67, 7
    %v69 = vsub.s32 3, %v68
    %v70 = vrot.slane %v53, %v69
    %v71 = vlaneseq
    %v72 = vshrl.u32 %v71, 7
    %v73 = vsub.s32 4, %v72
    %v74 = vrot.slane %v53, %v73
    %v75 = vlaneseq
    %v76 = vshrl.u32 %v75, 7
    %v77 = vsub.s32 5, %v76
    %v78 = vrot.slane %v53, %v77
    %v79 = vlaneseq
    %v80 = vshrl.u32 %v79, 7
    %v81 = vsub.s32 6, %v80
    %v82 = vrot.slane %v53, %v81
    %v106 = vunpack.c.l.b16 %v37
    %v107 = vunpack.c.h.b16 %v37
    %v108 = vunpack.c.l.b16 %v38
    %v109 = vunpack.c.h.b16 %v38
    %v110 = vunpack.c.l.b16 %v39
    %v111 = vunpack.c.h.b16 %v39
    %v112 = vunpack.c.l.b16 %v40
    %v113 = vunpack.c.l.b16 %v41
    %v114 = vunpack.c.h.b16 %v41
    %v115 = vunpack.c.l.b16 %v42
    %v116 = vunpack.c.h.b16 %v42
    %v117 = vunpack.c.l.b16 %v43
    %v118 = vunpack.c.h.b16 %v43
    %v119 = vunpack.c.l.b16 %v44
    %v120 = vunpack.c.l.b16 %v45
    %v121 = vunpack.c.h.b16 %v45
    %v122 = vunpack.c.l.b16 %v46
    %v123 = vunpack.c.h.b16 %v46
    %v124 = vunpack.c.l.b16 %v47
    %v125 = vunpack.c.h.b16 %v47
    %v126 = vunpack.c.l.b16 %v48
    %v127 = vunpack.c.l.b16 %v49
    %v128 = vunpack.c.h.b16 %v49
    %v129 = vunpack.c.l.b16 %v50
    %v130 = vunpack.c.h.b16 %v50
    %v131 = vunpack.c.l.b16 %v51
    %v132 = vunpack.c.h.b16 %v51
    %v133 = vunpack.c.l.b16 %v52
    %v134 = vpack.c.b16 %v113, %v106
    %v135 = vpack.c.b16 %v114, %v107
    %v136 = vpack.c.b16 %v115, %v108
    %v137 = vpack.c.b16 %v116, %v109
    %v138 = vpack.c.b16 %v117, %v110
    %v139 = vpack.c.b16 %v118, %v111
    %v140 = vpack.c.b16 %v119, %v112
    %v141 = vpack.c.b16 %v127, %v120
    %v142 = vpack.c.b16 %v128, %v121
    %v143 = vpack.c.b16 %v129, %v122
    %v144 = vpack.c.b16 %v130, %v123
    %v145 = vpack.c.b16 %v131, %v124
    %v146 = vpack.c.b16 %v132, %v125
    %v147 = vpack.c.b16 %v133, %v126
    %vm162 = vcmask 261120
    %v164 = vsel %vm162, %v36, 0
    %166 = vmatprep.subr.bf16.mxu0 %v135
    %167 = vmatpush1.bf16.msra.mxu0 %v134
    %168 = vmatprep.subr.bf16.mxu0 %v142
    %169 = vmatpush1.bf16.msra.mxu0 %v141
    %170 = vmatprep.subr.bf16.mxu0 0
    %171 = vmatpush1.bf16.msra.mxu0 0
    %172 = vmatprep.subr.bf16.mxu0 0
    %173 = vmatpush1.bf16.msra.mxu0 0
    %174 = vmatprep.subr.bf16.mxu0 0
    %175 = vmatpush1.bf16.msra.mxu0 0
    %176 = vmatprep.subr.bf16.mxu0 0
    %177 = vmatpush1.bf16.msra.mxu0 0
    %178 = vmatprep.subr.bf16.mxu0 0
    %179 = vmatpush1.bf16.msra.mxu0 0
    %180 = vmatprep.subr.bf16.mxu0 0
    %181 = vmatpush1.bf16.msra.mxu0 0
    %182 = vmatprep.subr.bf16.mxu0 0
    %183 = vmatpush1.bf16.msra.mxu0 0
    %184 = vmatprep.subr.bf16.mxu0 0
    %185 = vmatpush1.bf16.msra.mxu0 0
    %186 = vmatprep.subr.bf16.mxu0 0
    %187 = vmatpush1.bf16.msra.mxu0 0
    %188 = vmatprep.subr.bf16.mxu0 0
    %189 = vmatpush1.bf16.msra.mxu0 0
    %190 = vmatprep.subr.bf16.mxu0 0
    %191 = vmatpush1.bf16.msra.mxu0 0
    %192 = vmatprep.subr.bf16.mxu0 0
    %193 = vmatpush1.bf16.msra.mxu0 0
    %194 = vmatprep.subr.bf16.mxu0 0
    %195 = vmatpush1.bf16.msra.mxu0 0
    %196 = vmatprep.subr.bf16.mxu0 0
    %197 = vmatpush1.bf16.msra.mxu0 0
    %198 = vmatprep.mubr.bf16.mxu0 0
    %199 = vmatmul.mubr.bf16.gmra.mrb[0].mxu0 %v164
    %v200 = vpop.f32.mrb[0].mxu0
    %v201 = vadd.f32 %v58, %v200
    %v202 = vpop.f32.mrb[0].mxu0
    %v203 = vadd.f32 %v62, %v202
    %v204 = vpop.f32.mrb[0].mxu0
    %v205 = vpop.f32.mrb[0].mxu0
    %206 = vdwg.mxu0
    %207 = vmatprep.subr.bf16.mxu0 %v137
    %208 = vmatpush1.bf16.msra.mxu0 %v136
    %209 = vmatprep.subr.bf16.mxu0 %v144
    %210 = vmatpush1.bf16.msra.mxu0 %v143
    %211 = vmatprep.subr.bf16.mxu0 0
    %212 = vmatpush1.bf16.msra.mxu0 0
    %213 = vmatprep.subr.bf16.mxu0 0
    %214 = vmatpush1.bf16.msra.mxu0 0
    %215 = vmatprep.subr.bf16.mxu0 0
    %216 = vmatpush1.bf16.msra.mxu0 0
    %217 = vmatprep.subr.bf16.mxu0 0
    %218 = vmatpush1.bf16.msra.mxu0 0
    %219 = vmatprep.subr.bf16.mxu0 0
    %220 = vmatpush1.bf16.msra.mxu0 0
    %221 = vmatprep.subr.bf16.mxu0 0
    %222 = vmatpush1.bf16.msra.mxu0 0
    %223 = vmatprep.subr.bf16.mxu0 0
    %224 = vmatpush1.bf16.msra.mxu0 0
    %225 = vmatprep.subr.bf16.mxu0 0
    %226 = vmatpush1.bf16.msra.mxu0 0
    %227 = vmatprep.subr.bf16.mxu0 0
    %228 = vmatpush1.bf16.msra.mxu0 0
    %229 = vmatprep.subr.bf16.mxu0 0
    %230 = vmatpush1.bf16.msra.mxu0 0
    %231 = vmatprep.subr.bf16.mxu0 0
    %232 = vmatpush1.bf16.msra.mxu0 0
    %233 = vmatprep.subr.bf16.mxu0 0
    %234 = vmatpush1.bf16.msra.mxu0 0
    %235 = vmatprep.subr.bf16.mxu0 0
    %236 = vmatpush1.bf16.msra.mxu0 0
    %237 = vmatprep.subr.bf16.mxu0 0
    %238 = vmatpush1.bf16.msra.mxu0 0
    %239 = vmatprep.mubr.bf16.mxu0 0
    %240 = vmatmul.mubr.bf16.gmra.mrb[0].mxu0 %v164
    %v241 = vpop.f32.mrb[0].mxu0
    %v242 = vadd.f32 %v66, %v241
    %v243 = vpop.f32.mrb[0].mxu0
    %v244 = vadd.f32 %v70, %v243
    %v245 = vpop.f32.mrb[0].mxu0
    %v246 = vpop.f32.mrb[0].mxu0
    %247 = vdwg.mxu0
    %248 = vmatprep.subr.bf16.mxu0 %v139
    %249 = vmatpush1.bf16.msra.mxu0 %v138
    %250 = vmatprep.subr.bf16.mxu0 %v146
    %251 = vmatpush1.bf16.msra.mxu0 %v145
    %252 = vmatprep.subr.bf16.mxu0 0
    %253 = vmatpush1.bf16.msra.mxu0 0
    %254 = vmatprep.subr.bf16.mxu0 0
    %255 = vmatpush1.bf16.msra.mxu0 0
    %256 = vmatprep.subr.bf16.mxu0 0
    %257 = vmatpush1.bf16.msra.mxu0 0
    %258 = vmatprep.subr.bf16.mxu0 0
    %259 = vmatpush1.bf16.msra.mxu0 0
    %260 = vmatprep.subr.bf16.mxu0 0
    %261 = vmatpush1.bf16.msra.mxu0 0
    %262 = vmatprep.subr.bf16.mxu0 0
    %263 = vmatpush1.bf16.msra.mxu0 0
    %264 = vmatprep.subr.bf16.mxu0 0
    %265 = vmatpush1.bf16.msra.mxu0 0
    %266 = vmatprep.subr.bf16.mxu0 0
    %267 = vmatpush1.bf16.msra.mxu0 0
    %268 = vmatprep.subr.bf16.mxu0 0
    %269 = vmatpush1.bf16.msra.mxu0 0
    %270 = vmatprep.subr.bf16.mxu0 0
    %271 = vmatpush1.bf16.msra.mxu0 0
    %272 = vmatprep.subr.bf16.mxu0 0
    %273 = vmatpush1.bf16.msra.mxu0 0
    %274 = vmatprep.subr.bf16.mxu0 0
    %275 = vmatpush1.bf16.msra.mxu0 0
    %276 = vmatprep.subr.bf16.mxu0 0
    %277 = vmatpush1.bf16.msra.mxu0 0
    %278 = vmatprep.subr.bf16.mxu0 0
    %279 = vmatpush1.bf16.msra.mxu0 0
    %280 = vmatprep.mubr.bf16.mxu0 0
    %281 = vmatmul.mubr.bf16.gmra.mrb[0].mxu0 %v164
    %v282 = vpop.f32.mrb[0].mxu0
    %v283 = vadd.f32 %v74, %v282
    %v284 = vpop.f32.mrb[0].mxu0
    %v285 = vadd.f32 %v78, %v284
    %v286 = vpop.f32.mrb[0].mxu0
    %v287 = vpop.f32.mrb[0].mxu0
    %288 = vdwg.mxu0
    %289 = vmatprep.subr.bf16.mxu0 0
    %290 = vmatpush1.bf16.msra.mxu0 %v140
    %291 = vmatprep.subr.bf16.mxu0 0
    %292 = vmatpush1.bf16.msra.mxu0 %v147
    %293 = vmatprep.subr.bf16.mxu0 0
    %294 = vmatpush1.bf16.msra.mxu0 0
    %295 = vmatprep.subr.bf16.mxu0 0
    %296 = vmatpush1.bf16.msra.mxu0 0
    %297 = vmatprep.subr.bf16.mxu0 0
    %298 = vmatpush1.bf16.msra.mxu0 0
    %299 = vmatprep.subr.bf16.mxu0 0
    %300 = vmatpush1.bf16.msra.mxu0 0
    %301 = vmatprep.subr.bf16.mxu0 0
    %302 = vmatpush1.bf16.msra.mxu0 0
    %303 = vmatprep.subr.bf16.mxu0 0
    %304 = vmatpush1.bf16.msra.mxu0 0
    %305 = vmatprep.subr.bf16.mxu0 0
    %306 = vmatpush1.bf16.msra.mxu0 0
    %307 = vmatprep.subr.bf16.mxu0 0
    %308 = vmatpush1.bf16.msra.mxu0 0
    %309 = vmatprep.subr.bf16.mxu0 0
    %310 = vmatpush1.bf16.msra.mxu0 0
    %311 = vmatprep.subr.bf16.mxu0 0
    %312 = vmatpush1.bf16.msra.mxu0 0
    %313 = vmatprep.subr.bf16.mxu0 0
    %314 = vmatpush1.bf16.msra.mxu0 0
    %315 = vmatprep.subr.bf16.mxu0 0
    %316 = vmatpush1.bf16.msra.mxu0 0
    %317 = vmatprep.subr.bf16.mxu0 0
    %318 = vmatpush1.bf16.msra.mxu0 0
    %319 = vmatprep.subr.bf16.mxu0 0
    %320 = vmatpush1.bf16.msra.mxu0 0
    %321 = vmatprep.mubr.bf16.mxu0 0
    %322 = vmatmul.mubr.bf16.gmra.mrb[0].mxu0 %v164
    %v323 = vpop.f32.mrb[0].mxu0
    %v324 = vadd.f32 %v82, %v323
    %v325 = vpop.f32.mrb[0].mxu0
    %v326 = vpop.f32.mrb[0].mxu0
    %v327 = vpop.f32.mrb[0].mxu0
    %328 = vdwg.mxu0
    %v329 = vmax.f32 %v201, 0.0
    %v330 = vmax.f32 %v203, 0.0
    %v331 = vmax.f32 %v242, 0.0
    %v332 = vmax.f32 %v244, 0.0
    %v333 = vmax.f32 %v283, 0.0
    %v334 = vmax.f32 %v285, 0.0
    %v335 = vmax.f32 %v324, 0.0
    %v336 = vpack.c.bf16 %v329, %v329
    %v337 = vpack.c.bf16 %v330, %v330
    %v338 = vpack.c.bf16 %v331, %v331
    %v339 = vpack.c.bf16 %v332, %v332
    %v340 = vpack.c.bf16 %v333, %v333
    %v341 = vpack.c.bf16 %v334, %v334
    %v342 = vpack.c.bf16 %v335, %v335
    %v343 = vld [vmem:[#allocation2] sm:$0xf]
    %v344 = vld [vmem:[#allocation2 + $0x4] sm:$0xf]
    %v345 = vld [vmem:[#allocation2 + $0x8] sm:$0xf]
    %v346 = vld [vmem:[#allocation2 + $0xc] sm:$0xf]
    %v347 = vld [vmem:[#allocation2 + $0x10] sm:$0xf]
    %v348 = vld [vmem:[#allocation2 + $0x14] sm:$0xf]
    %v349 = vld [vmem:[#allocation2 + $0x18] sm:$0xf]
    %v350 = vld [vmem:[#allocation2 + $0x1c] sm:$0xf]
    %v351 = vld [vmem:[#allocation2 + $0x20] sm:$0xf]
    %v352 = vld [vmem:[#allocation2 + $0x24] sm:$0xf]
    %v353 = vld [vmem:[#allocation2 + $0x28] sm:$0xf]
    %v354 = vld [vmem:[#allocation2 + $0x2c] sm:$0xf]
    %v355 = vld [vmem:[#allocation2 + $0x30] sm:$0xf]
    %v356 = vld [vmem:[#allocation2 + $0x34] sm:$0xf]
    %v357 = vld [vmem:[#allocation2 + $0x38] sm:$0xf]
    %v358 = vld [vmem:[#allocation2 + $0x3c] sm:$0xf]
    %v359 = vld [vmem:[#allocation2 + $0x40] sm:$0xf]
    %v360 = vld [vmem:[#allocation2 + $0x44] sm:$0xf]
    %v361 = vld [vmem:[#allocation2 + $0x48] sm:$0xf]
    %v362 = vld [vmem:[#allocation2 + $0x4c] sm:$0xf]
    %v363 = vld [vmem:[#allocation2 + $0x50] sm:$0xf]
    %v364 = vld [vmem:[#allocation2 + $0x54] sm:$0xf]
    %v365 = vld [vmem:[#allocation2 + $0x58] sm:$0xf]
    %v366 = vld [vmem:[#allocation2 + $0x5c] sm:$0xf]
    %v367 = vld [vmem:[#allocation2 + $0x60] sm:$0xf]
    %v368 = vld [vmem:[#allocation2 + $0x64] sm:$0xf]
    %v369 = vld [vmem:[#allocation2 + $0x68] sm:$0xf]
    %v370 = vld [vmem:[#allocation2 + $0x6c] sm:$0xf]
    %v371 = vld [vmem:[#allocation2 + $0x70] sm:$0xf]
    %v372 = vld [vmem:[#allocation2 + $0x74] sm:$0xf]
    %v373 = vld [vmem:[#allocation2 + $0x78] sm:$0xf]
    %v374 = vld [vmem:[#allocation2 + $0x7c] sm:$0xf]
    %v375 = vld [vmem:[#allocation2 + $0x80] sm:$0xf]
    %v376 = vld [vmem:[#allocation2 + $0x84] sm:$0xf]
    %v377 = vld [vmem:[#allocation2 + $0x88] sm:$0xf]
    %v378 = vld [vmem:[#allocation2 + $0x8c] sm:$0xf]
    %v379 = vld [vmem:[#allocation2 + $0x90] sm:$0xf]
    %v380 = vld [vmem:[#allocation2 + $0x94] sm:$0xf]
    %v381 = vld [vmem:[#allocation2 + $0x98] sm:$0xf]
    %v382 = vld [vmem:[#allocation2 + $0x9c] sm:$0xf]
    %v383 = vld [vmem:[#allocation2 + $0xa0] sm:$0xf]
    %v384 = vld [vmem:[#allocation2 + $0xa4] sm:$0xf]
    %v385 = vld [vmem:[#allocation2 + $0xa8] sm:$0xf]
    %v386 = vld [vmem:[#allocation2 + $0xac] sm:$0xf]
    %v387 = vld [vmem:[#allocation2 + $0xb0] sm:$0xf]
    %v388 = vld [vmem:[#allocation2 + $0xb4] sm:$0xf]
    %v389 = vld [vmem:[#allocation2 + $0xb8] sm:$0xf]
    %v390 = vld [vmem:[#allocation2 + $0xbc] sm:$0xf]
    %v391 = vld [vmem:[#allocation2 + $0xc0] sm:$0xf]
    %v392 = vld [vmem:[#allocation2 + $0xc4] sm:$0xf]
    %v393 = vld [vmem:[#allocation2 + $0xc8] sm:$0xf]
    %v394 = vld [vmem:[#allocation2 + $0xcc] sm:$0xf]
    %v395 = vld [vmem:[#allocation2 + $0xd0] sm:$0xf]
    %v396 = vld [vmem:[#allocation2 + $0xd4] sm:$0xf]
    %v397 = vld [vmem:[#allocation2 + $0xd8] sm:$0xf]
    %v398 = vld [vmem:[#allocation2 + $0xdc] sm:$0xf]
    %v399 = vld [vmem:[#allocation2 + $0xe0] sm:$0xf]
    %v400 = vld [vmem:[#allocation2 + $0xe4] sm:$0xf]
    %v401 = vld [vmem:[#allocation2 + $0xe8] sm:$0xf]
    %v402 = vld [vmem:[#allocation2 + $0xec] sm:$0xf]
    %v403 = vld [vmem:[#allocation2 + $0xf0] sm:$0xf]
    %v404 = vld [vmem:[#allocation2 + $0xf4] sm:$0xf]
    %v405 = vld [vmem:[#allocation2 + $0xf8] sm:$0xf]
    %v406 = vld [vmem:[#allocation2 + $0xfc] sm:$0xf]
    %v407 = vld [vmem:[#allocation2 + $0x100] sm:$0xf]
    %v408 = vld [vmem:[#allocation2 + $0x104] sm:$0xf]
    %v409 = vld [vmem:[#allocation2 + $0x108] sm:$0xf]
    %v410 = vld [vmem:[#allocation2 + $0x10c] sm:$0xf]
    %v411 = vld [vmem:[#allocation2 + $0x110] sm:$0xf]
    %v412 = vld [vmem:[#allocation2 + $0x114] sm:$0xf]
    %v413 = vld [vmem:[#allocation2 + $0x118] sm:$0xf]
    %v414 = vld [vmem:[#allocation2 + $0x11c] sm:$0xf]
    %v415 = vld [vmem:[#allocation2 + $0x120] sm:$0xf]
    %v416 = vld [vmem:[#allocation2 + $0x124] sm:$0xf]
    %v417 = vld [vmem:[#allocation2 + $0x128] sm:$0xf]
    %v418 = vld [vmem:[#allocation2 + $0x12c] sm:$0xf]
    %v419 = vld [vmem:[#allocation2 + $0x130] sm:$0xf]
    %v420 = vld [vmem:[#allocation2 + $0x134] sm:$0xf]
    %v421 = vld [vmem:[#allocation2 + $0x138] sm:$0xf]
    %v422 = vld [vmem:[#allocation2 + $0x13c] sm:$0xf]
    %v423 = vld [vmem:[#allocation2 + $0x140] sm:$0xf]
    %v424 = vld [vmem:[#allocation2 + $0x144] sm:$0xf]
    %v425 = vld [vmem:[#allocation2 + $0x148] sm:$0xf]
    %v426 = vld [vmem:[#allocation2 + $0x14c] sm:$0xf]
    %v427 = vld [vmem:[#allocation2 + $0x150] sm:$0xf]
    %v428 = vld [vmem:[#allocation2 + $0x154] sm:$0xf]
    %v429 = vld [vmem:[#allocation2 + $0x158] sm:$0xf]
    %v430 = vld [vmem:[#allocation2 + $0x15c] sm:$0xf]
    %v431 = vld [vmem:[#allocation2 + $0x160] sm:$0xf]
    %v432 = vld [vmem:[#allocation2 + $0x164] sm:$0xf]
    %v433 = vld [vmem:[#allocation2 + $0x168] sm:$0xf]
    %v434 = vld [vmem:[#allocation2 + $0x16c] sm:$0xf]
    %v435 = vld [vmem:[#allocation2 + $0x170] sm:$0xf]
    %v436 = vld [vmem:[#allocation2 + $0x174] sm:$0xf]
    %v437 = vld [vmem:[#allocation2 + $0x178] sm:$0xf]
    %v438 = vld [vmem:[#allocation2 + $0x17c] sm:$0xf]
    %v439 = vld [vmem:[#allocation2 + $0x180] sm:$0xf]
    %v440 = vld [vmem:[#allocation2 + $0x184] sm:$0xf]
    %v441 = vld [vmem:[#allocation2 + $0x188] sm:$0xf]
    %v442 = vld [vmem:[#allocation2 + $0x18c] sm:$0xf]
    %v443 = vld [vmem:[#allocation2 + $0x190] sm:$0xf]
    %v444 = vld [vmem:[#allocation2 + $0x194] sm:$0xf]
    %v445 = vld [vmem:[#allocation2 + $0x198] sm:$0xf]
    %v446 = vld [vmem:[#allocation2 + $0x19c] sm:$0xf]
    %v447 = vld [vmem:[#allocation2 + $0x1a0] sm:$0xf]
    %v448 = vld [vmem:[#allocation2 + $0x1a4] sm:$0xf]
    %v449 = vld [vmem:[#allocation2 + $0x1a8] sm:$0xf]
    %v450 = vld [vmem:[#allocation2 + $0x1ac] sm:$0xf]
    %v451 = vld [vmem:[#allocation2 + $0x1b0] sm:$0xf]
    %v452 = vld [vmem:[#allocation2 + $0x1b4] sm:$0xf]
    %v453 = vld [vmem:[#allocation2 + $0x1b8] sm:$0xf]
    %v454 = vld [vmem:[#allocation2 + $0x1bc] sm:$0xf]
    %v455 = vld [vmem:[%s4] sm:$0x1]
    %v457 = vlaneseq
    %v458 = vshrl.u32 %v457, 7
    %v459 = vsub.s32 0, %v458
    %v460 = vrot.slane %v455, %v459
    %v574 = vunpack.c.l.b16 %v343
    %v575 = vunpack.c.l.b16 %v344
    %v576 = vunpack.c.l.b16 %v345
    %v577 = vunpack.c.l.b16 %v346
    %v578 = vunpack.c.l.b16 %v347
    %v579 = vunpack.c.l.b16 %v348
    %v580 = vunpack.c.l.b16 %v349
    %v581 = vunpack.c.l.b16 %v350
    %v582 = vunpack.c.l.b16 %v351
    %v583 = vunpack.c.l.b16 %v352
    %v584 = vunpack.c.l.b16 %v353
    %v585 = vunpack.c.l.b16 %v354
    %v586 = vunpack.c.l.b16 %v355
    %v587 = vunpack.c.l.b16 %v356
    %v588 = vunpack.c.l.b16 %v357
    %v589 = vunpack.c.l.b16 %v358
    %v590 = vunpack.c.l.b16 %v359
    %v591 = vunpack.c.l.b16 %v360
    %v592 = vunpack.c.l.b16 %v361
    %v593 = vunpack.c.l.b16 %v362
    %v594 = vunpack.c.l.b16 %v363
    %v595 = vunpack.c.l.b16 %v364
    %v596 = vunpack.c.l.b16 %v365
    %v597 = vunpack.c.l.b16 %v366
    %v598 = vunpack.c.l.b16 %v367
    %v599 = vunpack.c.l.b16 %v368
    %v600 = vunpack.c.l.b16 %v369
    %v601 = vunpack.c.l.b16 %v370
    %v602 = vunpack.c.l.b16 %v371
    %v603 = vunpack.c.l.b16 %v372
    %v604 = vunpack.c.l.b16 %v373
    %v605 = vunpack.c.l.b16 %v374
    %v606 = vunpack.c.l.b16 %v375
    %v607 = vunpack.c.l.b16 %v376
    %v608 = vunpack.c.l.b16 %v377
    %v609 = vunpack.c.l.b16 %v378
    %v610 = vunpack.c.l.b16 %v379
    %v611 = vunpack.c.l.b16 %v380
    %v612 = vunpack.c.l.b16 %v381
    %v613 = vunpack.c.l.b16 %v382
    %v614 = vunpack.c.l.b16 %v383
    %v615 = vunpack.c.l.b16 %v384
    %v616 = vunpack.c.l.b16 %v385
    %v617 = vunpack.c.l.b16 %v386
    %v618 = vunpack.c.l.b16 %v387
    %v619 = vunpack.c.l.b16 %v388
    %v620 = vunpack.c.l.b16 %v389
    %v621 = vunpack.c.l.b16 %v390
    %v622 = vunpack.c.l.b16 %v391
    %v623 = vunpack.c.l.b16 %v392
    %v624 = vunpack.c.l.b16 %v393
    %v625 = vunpack.c.l.b16 %v394
    %v626 = vunpack.c.l.b16 %v395
    %v627 = vunpack.c.l.b16 %v396
    %v628 = vunpack.c.l.b16 %v397
    %v629 = vunpack.c.l.b16 %v398
    %v630 = vunpack.c.l.b16 %v399
    %v631 = vunpack.c.l.b16 %v400
    %v632 = vunpack.c.l.b16 %v401
    %v633 = vunpack.c.l.b16 %v402
    %v634 = vunpack.c.l.b16 %v403
    %v635 = vunpack.c.l.b16 %v404
    %v636 = vunpack.c.l.b16 %v405
    %v637 = vunpack.c.l.b16 %v406
    %v638 = vunpack.c.l.b16 %v407
    %v639 = vunpack.c.l.b16 %v408
    %v640 = vunpack.c.l.b16 %v409
    %v641 = vunpack.c.l.b16 %v410
    %v642 = vunpack.c.l.b16 %v411
    %v643 = vunpack.c.l.b16 %v412
    %v644 = vunpack.c.l.b16 %v413
    %v645 = vunpack.c.l.b16 %v414
    %v646 = vunpack.c.l.b16 %v415
    %v647 = vunpack.c.l.b16 %v416
    %v648 = vunpack.c.l.b16 %v417
    %v649 = vunpack.c.l.b16 %v418
    %v650 = vunpack.c.l.b16 %v419
    %v651 = vunpack.c.l.b16 %v420
    %v652 = vunpack.c.l.b16 %v421
    %v653 = vunpack.c.l.b16 %v422
    %v654 = vunpack.c.l.b16 %v423
    %v655 = vunpack.c.l.b16 %v424
    %v656 = vunpack.c.l.b16 %v425
    %v657 = vunpack.c.l.b16 %v426
    %v658 = vunpack.c.l.b16 %v427
    %v659 = vunpack.c.l.b16 %v428
    %v660 = vunpack.c.l.b16 %v429
    %v661 = vunpack.c.l.b16 %v430
    %v662 = vunpack.c.l.b16 %v431
    %v663 = vunpack.c.l.b16 %v432
    %v664 = vunpack.c.l.b16 %v433
    %v665 = vunpack.c.l.b16 %v434
    %v666 = vunpack.c.l.b16 %v435
    %v667 = vunpack.c.l.b16 %v436
    %v668 = vunpack.c.l.b16 %v437
    %v669 = vunpack.c.l.b16 %v438
    %v670 = vunpack.c.l.b16 %v439
    %v671 = vunpack.c.l.b16 %v440
    %v672 = vunpack.c.l.b16 %v441
    %v673 = vunpack.c.l.b16 %v442
    %v674 = vunpack.c.l.b16 %v443
    %v675 = vunpack.c.l.b16 %v444
    %v676 = vunpack.c.l.b16 %v445
    %v677 = vunpack.c.l.b16 %v446
    %v678 = vunpack.c.l.b16 %v447
    %v679 = vunpack.c.l.b16 %v448
    %v680 = vunpack.c.l.b16 %v449
    %v681 = vunpack.c.l.b16 %v450
    %v682 = vunpack.c.l.b16 %v451
    %v683 = vunpack.c.l.b16 %v452
    %v684 = vunpack.c.l.b16 %v453
    %v685 = vunpack.c.l.b16 %v454
    %v686 = vpack.c.b16 %v575, %v574
    %v687 = vpack.c.b16 %v577, %v576
    %v688 = vpack.c.b16 %v579, %v578
    %v689 = vpack.c.b16 %v581, %v580
    %v690 = vpack.c.b16 %v583, %v582
    %v691 = vpack.c.b16 %v585, %v584
    %v692 = vpack.c.b16 %v587, %v586
    %v693 = vpack.c.b16 %v589, %v588
    %v694 = vpack.c.b16 %v591, %v590
    %v695 = vpack.c.b16 %v593, %v592
    %v696 = vpack.c.b16 %v595, %v594
    %v697 = vpack.c.b16 %v597, %v596
    %v698 = vpack.c.b16 %v599, %v598
    %v699 = vpack.c.b16 %v601, %v600
    %v700 = vpack.c.b16 %v603, %v602
    %v701 = vpack.c.b16 %v605, %v604
    %v702 = vpack.c.b16 %v607, %v606
    %v703 = vpack.c.b16 %v609, %v608
    %v704 = vpack.c.b16 %v611, %v610
    %v705 = vpack.c.b16 %v613, %v612
    %v706 = vpack.c.b16 %v615, %v614
    %v707 = vpack.c.b16 %v617, %v616
    %v708 = vpack.c.b16 %v619, %v618
    %v709 = vpack.c.b16 %v621, %v620
    %v710 = vpack.c.b16 %v623, %v622
    %v711 = vpack.c.b16 %v625, %v624
    %v712 = vpack.c.b16 %v627, %v626
    %v713 = vpack.c.b16 %v629, %v628
    %v714 = vpack.c.b16 %v631, %v630
    %v715 = vpack.c.b16 %v633, %v632
    %v716 = vpack.c.b16 %v635, %v634
    %v717 = vpack.c.b16 %v637, %v636
    %v718 = vpack.c.b16 %v639, %v638
    %v719 = vpack.c.b16 %v641, %v640
    %v720 = vpack.c.b16 %v643, %v642
    %v721 = vpack.c.b16 %v645, %v644
    %v722 = vpack.c.b16 %v647, %v646
    %v723 = vpack.c.b16 %v649, %v648
    %v724 = vpack.c.b16 %v651, %v650
    %v725 = vpack.c.b16 %v653, %v652
    %v726 = vpack.c.b16 %v655, %v654
    %v727 = vpack.c.b16 %v657, %v656
    %v728 = vpack.c.b16 %v659, %v658
    %v729 = vpack.c.b16 %v661, %v660
    %v730 = vpack.c.b16 %v663, %v662
    %v731 = vpack.c.b16 %v665, %v664
    %v732 = vpack.c.b16 %v667, %v666
    %v733 = vpack.c.b16 %v669, %v668
    %v734 = vpack.c.b16 %v671, %v670
    %v735 = vpack.c.b16 %v673, %v672
    %v736 = vpack.c.b16 %v675, %v674
    %v737 = vpack.c.b16 %v677, %v676
    %v738 = vpack.c.b16 %v679, %v678
    %v739 = vpack.c.b16 %v681, %v680
    %v740 = vpack.c.b16 %v683, %v682
    %v741 = vpack.c.b16 %v685, %v684
    %798 = vmatprep.subr.bf16.mxu0 0
    %799 = vmatpush1.bf16.msra.mxu0 %v686
    %800 = vmatprep.subr.bf16.mxu0 0
    %801 = vmatpush1.bf16.msra.mxu0 %v687
    %802 = vmatprep.subr.bf16.mxu0 0
    %803 = vmatpush1.bf16.msra.mxu0 %v688
    %804 = vmatprep.subr.bf16.mxu0 0
    %805 = vmatpush1.bf16.msra.mxu0 %v689
    %806 = vmatprep.subr.bf16.mxu0 0
    %807 = vmatpush1.bf16.msra.mxu0 %v690
    %808 = vmatprep.subr.bf16.mxu0 0
    %809 = vmatpush1.bf16.msra.mxu0 %v691
    %810 = vmatprep.subr.bf16.mxu0 0
    %811 = vmatpush1.bf16.msra.mxu0 %v692
    %812 = vmatprep.subr.bf16.mxu0 0
    %813 = vmatpush1.bf16.msra.mxu0 %v693
    %814 = vmatprep.subr.bf16.mxu0 0
    %815 = vmatpush1.bf16.msra.mxu0 %v694
    %816 = vmatprep.subr.bf16.mxu0 0
    %817 = vmatpush1.bf16.msra.mxu0 %v695
    %818 = vmatprep.subr.bf16.mxu0 0
    %819 = vmatpush1.bf16.msra.mxu0 %v696
    %820 = vmatprep.subr.bf16.mxu0 0
    %821 = vmatpush1.bf16.msra.mxu0 %v697
    %822 = vmatprep.subr.bf16.mxu0 0
    %823 = vmatpush1.bf16.msra.mxu0 %v698
    %824 = vmatprep.subr.bf16.mxu0 0
    %825 = vmatpush1.bf16.msra.mxu0 %v699
    %826 = vmatprep.subr.bf16.mxu0 0
    %827 = vmatpush1.bf16.msra.mxu0 %v700
    %828 = vmatprep.subr.bf16.mxu0 0
    %829 = vmatpush1.bf16.msra.mxu0 %v701
    %830 = vmatprep.mubr.bf16.mxu0 %v337
    %831 = vmatmul.mubr.bf16.gmra.mrb[0].mxu0 %v336
    %v832 = vpop.f32.mrb[0].mxu0
    %v833 = vadd.f32 %v460, %v832
    %v834 = vpop.f32.mrb[0].mxu0
    %v835 = vpop.f32.mrb[0].mxu0
    %v836 = vpop.f32.mrb[0].mxu0
    %837 = vdwg.mxu0
    %838 = vmatprep.subr.bf16.mxu0 0
    %839 = vmatpush1.bf16.msra.mxu0 %v702
    %840 = vmatprep.subr.bf16.mxu0 0
    %841 = vmatpush1.bf16.msra.mxu0 %v703
    %842 = vmatprep.subr.bf16.mxu0 0
    %843 = vmatpush1.bf16.msra.mxu0 %v704
    %844 = vmatprep.subr.bf16.mxu0 0
    %845 = vmatpush1.bf16.msra.mxu0 %v705
    %846 = vmatprep.subr.bf16.mxu0 0
    %847 = vmatpush1.bf16.msra.mxu0 %v706
    %848 = vmatprep.subr.bf16.mxu0 0
    %849 = vmatpush1.bf16.msra.mxu0 %v707
    %850 = vmatprep.subr.bf16.mxu0 0
    %851 = vmatpush1.bf16.msra.mxu0 %v708
    %852 = vmatprep.subr.bf16.mxu0 0
    %853 = vmatpush1.bf16.msra.mxu0 %v709
    %854 = vmatprep.subr.bf16.mxu0 0
    %855 = vmatpush1.bf16.msra.mxu0 %v710
    %856 = vmatprep.subr.bf16.mxu0 0
    %857 = vmatpush1.bf16.msra.mxu0 %v711
    %858 = vmatprep.subr.bf16.mxu0 0
    %859 = vmatpush1.bf16.msra.mxu0 %v712
    %860 = vmatprep.subr.bf16.mxu0 0
    %861 = vmatpush1.bf16.msra.mxu0 %v713
    %862 = vmatprep.subr.bf16.mxu0 0
    %863 = vmatpush1.bf16.msra.mxu0 %v714
    %864 = vmatprep.subr.bf16.mxu0 0
    %865 = vmatpush1.bf16.msra.mxu0 %v715
    %866 = vmatprep.subr.bf16.mxu0 0
    %867 = vmatpush1.bf16.msra.mxu0 %v716
    %868 = vmatprep.subr.bf16.mxu0 0
    %869 = vmatpush1.bf16.msra.mxu0 %v717
    %870 = vmatprep.mubr.bf16.mxu0 %v339
    %871 = vmatmul.mubr.bf16.gmra.mrb[0].mxu0 %v338
    %v872 = vpop.f32.mrb[0].mxu0
    %v873 = vadd.f32 %v833, %v872
    %v874 = vpop.f32.mrb[0].mxu0
    %v875 = vpop.f32.mrb[0].mxu0
    %v876 = vpop.f32.mrb[0].mxu0
    %877 = vdwg.mxu0
    %878 = vmatprep.subr.bf16.mxu0 0
    %879 = vmatpush1.bf16.msra.mxu0 %v718
    %880 = vmatprep.subr.bf16.mxu0 0
    %881 = vmatpush1.bf16.msra.mxu0 %v719
    %882 = vmatprep.subr.bf16.mxu0 0
    %883 = vmatpush1.bf16.msra.mxu0 %v720
    %884 = vmatprep.subr.bf16.mxu0 0
    %885 = vmatpush1.bf16.msra.mxu0 %v721
    %886 = vmatprep.subr.bf16.mxu0 0
    %887 = vmatpush1.bf16.msra.mxu0 %v722
    %888 = vmatprep.subr.bf16.mxu0 0
    %889 = vmatpush1.bf16.msra.mxu0 %v723
    %890 = vmatprep.subr.bf16.mxu0 0
    %891 = vmatpush1.bf16.msra.mxu0 %v724
    %892 = vmatprep.subr.bf16.mxu0 0
    %893 = vmatpush1.bf16.msra.mxu0 %v725
    %894 = vmatprep.subr.bf16.mxu0 0
    %895 = vmatpush1.bf16.msra.mxu0 %v726
    %896 = vmatprep.subr.bf16.mxu0 0
    %897 = vmatpush1.bf16.msra.mxu0 %v727
    %898 = vmatprep.subr.bf16.mxu0 0
    %899 = vmatpush1.bf16.msra.mxu0 %v728
    %900 = vmatprep.subr.bf16.mxu0 0
    %901 = vmatpush1.bf16.msra.mxu0 %v729
    %902 = vmatprep.subr.bf16.mxu0 0
    %903 = vmatpush1.bf16.msra.mxu0 %v730
    %904 = vmatprep.subr.bf16.mxu0 0
    %905 = vmatpush1.bf16.msra.mxu0 %v731
    %906 = vmatprep.subr.bf16.mxu0 0
    %907 = vmatpush1.bf16.msra.mxu0 %v732
    %908 = vmatprep.subr.bf16.mxu0 0
    %909 = vmatpush1.bf16.msra.mxu0 %v733
    %910 = vmatprep.mubr.bf16.mxu0 %v341
    %911 = vmatmul.mubr.bf16.gmra.mrb[0].mxu0 %v340
    %v912 = vpop.f32.mrb[0].mxu0
    %v913 = vadd.f32 %v873, %v912
    %v914 = vpop.f32.mrb[0].mxu0
    %v915 = vpop.f32.mrb[0].mxu0
    %v916 = vpop.f32.mrb[0].mxu0
    %917 = vdwg.mxu0
    %918 = vmatprep.subr.bf16.mxu0 0
    %919 = vmatpush1.bf16.msra.mxu0 %v734
    %920 = vmatprep.subr.bf16.mxu0 0
    %921 = vmatpush1.bf16.msra.mxu0 %v735
    %922 = vmatprep.subr.bf16.mxu0 0
    %923 = vmatpush1.bf16.msra.mxu0 %v736
    %924 = vmatprep.subr.bf16.mxu0 0
    %925 = vmatpush1.bf16.msra.mxu0 %v737
    %926 = vmatprep.subr.bf16.mxu0 0
    %927 = vmatpush1.bf16.msra.mxu0 %v738
    %928 = vmatprep.subr.bf16.mxu0 0
    %929 = vmatpush1.bf16.msra.mxu0 %v739
    %930 = vmatprep.subr.bf16.mxu0 0
    %931 = vmatpush1.bf16.msra.mxu0 %v740
    %932 = vmatprep.subr.bf16.mxu0 0
    %933 = vmatpush1.bf16.msra.mxu0 %v741
    %934 = vmatprep.subr.bf16.mxu0 0
    %935 = vmatpush1.bf16.msra.mxu0 0
    %936 = vmatprep.subr.bf16.mxu0 0
    %937 = vmatpush1.bf16.msra.mxu0 0
    %938 = vmatprep.subr.bf16.mxu0 0
    %939 = vmatpush1.bf16.msra.mxu0 0
    %940 = vmatprep.subr.bf16.mxu0 0
    %941 = vmatpush1.bf16.msra.mxu0 0
    %942 = vmatprep.subr.bf16.mxu0 0
    %943 = vmatpush1.bf16.msra.mxu0 0
    %944 = vmatprep.subr.bf16.mxu0 0
    %945 = vmatpush1.bf16.msra.mxu0 0
    %946 = vmatprep.subr.bf16.mxu0 0
    %947 = vmatpush1.bf16.msra.mxu0 0
    %948 = vmatprep.subr.bf16.mxu0 0
    %949 = vmatpush1.bf16.msra.mxu0 0
    %950 = vmatprep.mubr.bf16.mxu0 0
    %951 = vmatmul.mubr.bf16.gmra.mrb[0].mxu0 %v342
    %v952 = vpop.f32.mrb[0].mxu0
    %v953 = vadd.f32 %v913, %v952
    %v954 = vpop.f32.mrb[0].mxu0
    %v955 = vpop.f32.mrb[0].mxu0
    %v956 = vpop.f32.mrb[0].mxu0
    %957 = vdwg.mxu0
    %958 = vst [vmem:[#allocation5] sm:$0xff] %v953
    // Predicated region
    $region26: #{forward.1} parent=1 // pred_check
      _
    $region27: #{forward.1} parent=1 // pred_check_branch
      %960 = sbr.rel (0) target = $region29
    $region28: #{forward.1} parent=1 // pred_region
      %s962 = ssub.s32 128, 128
      %963 = vsyncadd [#allocation4], %s962
      %s965 = sshll.u32 [#allocation5], 4
      %s966 = int_to_ptr.vmem [resolvable:$true] %s965
      %968 = dma.vmem_to_hbm [thread:$0]  %s966, 128, %s5, [#allocation4]
    $region29: #{forward.1} parent=1 // pred_fallthru
      _
    // Predicated region
    $region30: #{forward.1} parent=1 // pred_check
      _
    $region31: #{forward.1} parent=1 // pred_check_branch
      %970 = sbr.rel (0) target = $region33
    $region32: #{forward.1} parent=1 // pred_region
      %971 = dma.done [#allocation4], 128
    $region33: #{forward.1} parent=1 // pred_fallthru
      _
    %972 = vsyncpa [#allocation3], 1
    %973 = vsyncpa [#allocation4], 1

</llo_original>
